<compile_context>
chip_gen: v6e
topology: v6e:2x2x1
jax: 0.10.0
libtpu: 0.0.40
codegen_flags: <defaults>
</compile_context>

<pallas_src>
import functools

import jax
import jax.numpy as jnp
from jax.experimental import pallas as pl
from jax.experimental.pallas import tpu as pltpu


def _round_up(a, m):
    return ((a + m - 1) // m) * m


def _largest_divisor_leq(n, cap):
    for d in range(min(n, cap), 0, -1):
        if n % d == 0:
            return d
    return 1


def _tds_kernel(*refs, kernel_size, stride, t_tile, eps, has_halo, use_mxu,
                mxu_bf16):
    """One (batch-block, time-tile) grid step, NCW layout (time in lanes).

    refs (in order):
      x      : (B_blk, C_in, T_blk)   input time tile
      [halo] : (1, B_blk, C_in, k-1)  prev-tile tail (only when has_halo)
      wdw    : (C_in, k)              depthwise taps
      bdw    : (C_in, 1)              depthwise bias
      wpw    : (C_out, C_in)          pointwise weight
      bpw    : (C_out, 1)             pointwise bias
      g,beta : (C_out, 1)             LayerNorm affine
      o      : (B_blk, C_out, t_tile) output time tile
    """
    if has_halo:
        (x_ref, halo_ref, wdw_ref, bdw_ref, wpw_ref, bpw_ref,
         g_ref, beta_ref, o_ref) = refs
    else:
        (x_ref, wdw_ref, bdw_ref, wpw_ref, bpw_ref,
         g_ref, beta_ref, o_ref) = refs
        halo_ref = None

    k = kernel_size
    halo = k - 1

    x = x_ref[...].astype(jnp.float32)            # (B_blk, C_in, T_blk)
    b_blk, c_in, t_blk = x.shape

    # Hoisted weight loads / casts (all VPU math stays f32; v5e has no bf16 VPU).
    wdw = wdw_ref[...].astype(jnp.float32)        # (C_in, k)
    bdw = bdw_ref[...].astype(jnp.float32)        # (C_in, 1)
    wpw = wpw_ref[...].astype(jnp.float32)        # (C_out, C_in)
    bpw = bpw_ref[...].astype(jnp.float32)        # (C_out, 1)
    gam = g_ref[...].astype(jnp.float32)          # (C_out, 1)
    bet = beta_ref[...].astype(jnp.float32)       # (C_out, 1)
    c_out = wpw.shape[0]

    # ---------------- depthwise causal conv + bias + ReLU ----------------
    if stride == 1:
        # No concatenate: each tap is an aligned XLU roll of x, with the
        # first (halo - j) lanes spliced from the causal boundary (zeros on
        # the first / only tile, previous-tile tail columns otherwise).
        hpad = None
        lane = None
        if halo > 0:
            lane = jax.lax.broadcasted_iota(jnp.int32, (1, 1, t_blk), 2)
            if has_halo:
                hcols = halo_ref[0].astype(jnp.float32)    # (B_blk, C_in, halo)
                hpad = jnp.concatenate(
                    [hcols,
                     jnp.zeros((b_blk, c_in, t_blk - halo), jnp.float32)],
                    axis=2)                                # halo cols in lanes [0, halo)
        acc = jnp.zeros((b_blk, c_in, t_blk), jnp.float32)
        for j in range(k):                                  # static unroll
            s = halo - j
            w_j = wdw[:, j:j + 1].reshape(1, c_in, 1)
            if s == 0:
                tap = x
            else:
                xs = pltpu.roll(x, s, 2)                    # tap[m] = x[m - s]
                if has_halo:
                    # boundary value at lane m (< s) is hcols[m + j]
                    hs = hpad if j == 0 else pltpu.roll(hpad, t_blk - j, 2)
                    tap = jnp.where(lane < s, hs, xs)
                else:
                    tap = jnp.where(lane < s, 0.0, xs)      # causal zero pad
            acc = acc + tap * w_j
    else:
        # stride > 1 (rare): explicit window + per-tap decimation.
        if halo > 0:
            if has_halo:
                hcols = halo_ref[0].astype(jnp.float32)
            else:
                hcols = jnp.zeros((b_blk, c_in, halo), jnp.float32)
            window = jnp.concatenate([hcols, x], axis=2)    # (B,Ci,T_blk+halo)
        else:
            window = x
        acc = jnp.zeros((b_blk, c_in, t_tile), jnp.float32)
        for j in range(k):
            tap = window[:, :, j:j + t_tile * stride]
            tap = tap.reshape(b_blk, c_in, t_tile, stride)[:, :, :, 0]
            acc = acc + tap * wdw[:, j:j + 1].reshape(1, c_in, 1)

    acc = jnp.maximum(acc + bdw.reshape(1, c_in, 1), 0.0)   # ReLU

    # ------------- pointwise 1x1 conv + ReLU + LayerNorm -----------------
    wpw_mm = wpw.astype(jnp.bfloat16) if (use_mxu and mxu_bf16) else wpw
    inv_c = 1.0 / c_out
    t_out_blk = acc.shape[2]
    for b in range(b_blk):                       # static unroll (B_blk small)
        a_b = acc[b]                             # (C_in, t_out_blk)
        if use_mxu:
            rhs = a_b.astype(jnp.bfloat16) if mxu_bf16 else a_b
            y = jnp.dot(wpw_mm, rhs, preferred_element_type=jnp.float32)
        else:
            # Tiny channel counts: VPU outer-product accumulation, skip MXU.
            y = jnp.zeros((c_out, t_out_blk), jnp.float32)
            for ci in range(c_in):
                y = y + wpw[:, ci:ci + 1] * a_b[ci:ci + 1, :]
        y = jnp.maximum(y + bpw, 0.0)            # ReLU

        # LayerNorm over channels (sublane axis), fused one-pass stats.
        s1 = jnp.sum(y, axis=0, keepdims=True)
        s2 = jnp.sum(y * y, axis=0, keepdims=True)
        mean = s1 * inv_c
        var = jnp.maximum(s2 * inv_c - mean * mean, 0.0)
        yn = (y - mean) * jax.lax.rsqrt(var + eps)
        yn = yn * gam + bet
        o_ref[b] = yn.astype(o_ref.dtype)        # lane-dense store


def tds_conv(x_ncw, params, *, kernel_size, stride=1, eps=1e-5,
             t_block_cap=None, interpret=False):
    """TDSConv forward. x_ncw: (B, C_in, T). Params in PyTorch layouts.

    Returns (B, C_out, T_out) with T_out = floor((T-1)/stride) + 1.
    """
    wdw, bdw, wpw, bpw, gamma, beta = params
    B, C_in, T = x_ncw.shape
    k = kernel_size
    halo = k - 1
    C_out = wpw.shape[0]
    T_out = (T - 1) // stride + 1
    io_bytes = jnp.dtype(x_ncw.dtype).itemsize

    # Kernel-friendly parameter layouts (tiny reshapes, no movement of x).
    wdw_k = wdw.reshape(C_in, k)
    bdw_k = bdw.reshape(C_in, 1)
    wpw_k = wpw.reshape(C_out, C_in)
    bpw_k = bpw.reshape(C_out, 1)
    g_k = gamma.reshape(C_out, 1)
    b_k = beta.reshape(C_out, 1)

    # ---- per-chip VMEM sizing (v5e/v6e: 128 MiB, v7x: 64 MiB) ----
    try:
        vmem_cap = int(pltpu.get_tpu_info().vmem_capacity_bytes)
    except Exception:
        vmem_cap = 64 * 1024 * 1024                       # conservative fallback
    tile_budget = int(0.40 * vmem_cap)                    # working-set target
    vmem_limit = max(32 * 1024 * 1024,
                     min(int(0.80 * vmem_cap), 100 * 1024 * 1024))

    # ---- pack batch rows per block in small-channel regimes ----
    B_blk = _largest_divisor_leq(B, 8) if (C_in <= 32 and C_out <= 32) else 1

    # ---- choose time tiling (largest lane-aligned tile within budget) ----
    lane_unit = 128 * stride

    def est_bytes(t_blk):
        t_t = t_blk // stride
        io = 2 * B_blk * (C_in * t_blk + C_out * t_t) * io_bytes   # dbl-buffered IO
        tmp = 4 * B_blk * (C_in * t_blk + C_out * t_t) * 4         # f32 temporaries
        return io + tmp

    t_tile_full = _round_up(max(T_out, 1), 128)           # lane-dense single tile
    T_blk_full = t_tile_full * stride
    T_blk_cap = min(T_blk_full, 8192 * stride)
    if t_block_cap is not None:
        T_blk_cap = min(T_blk_cap, _round_up(t_block_cap, lane_unit))

    T_blk = lane_unit
    cand = 2 * lane_unit
    while cand <= T_blk_cap and est_bytes(cand) <= tile_budget:
        T_blk = cand
        cand += lane_unit
    if halo >= T_blk:                                      # pathological kernels
        T_blk = T_blk_full

    t_tile = T_blk // stride
    n_t = pl.cdiv(T_out, t_tile)
    T_padded = n_t * T_blk
    T_out_pad = n_t * t_tile

    if T_padded > T:
        x_in = jnp.pad(x_ncw, ((0, 0), (0, 0), (0, T_padded - T)))
    elif T_padded < T:
        x_in = x_ncw[:, :, :T_padded]      # trailing inputs unused by any output
    else:
        x_in = x_ncw

    # ---- tiny halo side input: last (k-1) input columns of the previous tile
    # (replaces the sequential carry -> both grid axes become parallel). ----
    has_halo = (n_t > 1) and (halo > 0)
    if has_halo:
        xr = x_in.reshape(B, C_in, n_t, T_blk)
        tails = xr[:, :, :n_t - 1, T_blk - halo:]                   # (B,Ci,n_t-1,h)
        halo_prev = jnp.concatenate(
            [jnp.zeros((B, C_in, 1, halo), x_in.dtype), tails], axis=2)
        halo_arr = jnp.transpose(halo_prev, (2, 0, 1, 3))           # (n_t,B,Ci,h)

    use_mxu = C_in > 8                       # tiny contractions stay on the VPU
    mxu_bf16 = use_mxu and min(C_in, C_out) >= 128

    kernel = functools.partial(
        _tds_kernel, kernel_size=k, stride=stride, t_tile=t_tile, eps=eps,
        has_halo=has_halo, use_mxu=use_mxu, mxu_bf16=mxu_bf16)

    in_specs = [pl.BlockSpec((B_blk, C_in, T_blk), lambda b, t: (b, 0, t))]
    inputs = [x_in]
    if has_halo:
        in_specs.append(
            pl.BlockSpec((1, B_blk, C_in, halo), lambda b, t: (t, b, 0, 0)))
        inputs.append(halo_arr)
    in_specs += [
        pl.BlockSpec((C_in, k), lambda b, t: (0, 0)),
        pl.BlockSpec((C_in, 1), lambda b, t: (0, 0)),
        pl.BlockSpec((C_out, C_in), lambda b, t: (0, 0)),
        pl.BlockSpec((C_out, 1), lambda b, t: (0, 0)),
        pl.BlockSpec((C_out, 1), lambda b, t: (0, 0)),
        pl.BlockSpec((C_out, 1), lambda b, t: (0, 0)),
    ]
    inputs += [wdw_k, bdw_k, wpw_k, bpw_k, g_k, b_k]

    out = pl.pallas_call(
        kernel,
        out_shape=jax.ShapeDtypeStruct((B, C_out, T_out_pad), x_ncw.dtype),
        grid_spec=pltpu.PrefetchScalarGridSpec(
            num_scalar_prefetch=0,
            grid=(B // B_blk, n_t),
            in_specs=in_specs,
            out_specs=pl.BlockSpec((B_blk, C_out, t_tile),
                                   lambda b, t: (b, 0, t)),
        ),
        compiler_params=pltpu.CompilerParams(
            # No cross-tile carry: both axes are independent, so a v7x
            # megacore can split (batch-block x time-tile) across both TCs.
            dimension_semantics=("parallel", "parallel"),
            vmem_limit_bytes=vmem_limit,
        ),
        interpret=interpret,
    )(*inputs)

    return out[:, :, :T_out] if T_out_pad != T_out else out


def tds_conv_ref(x_ncw, params, *, kernel_size, stride=1, eps=1e-5):
    """Pure-JAX reference mirroring the PyTorch forward (eval mode), NCW."""
    wdw, bdw, wpw, bpw, gamma, beta = params
    k = kernel_size
    x = x_ncw.astype(jnp.float32)
    B, C_in, T = x.shape
    if k > 1:
        x = jnp.pad(x, ((0, 0), (0, 0), (k - 1, 0)))     # causal left pad
    T_out = (T - 1) // stride + 1
    wd = wdw.reshape(C_in, k)
    acc = jnp.zeros((B, C_in, T_out), jnp.float32)
    for j in range(k):
        acc = acc + (x[:, :, j:j + (T_out - 1) * stride + 1:stride]
                     * wd[:, j][None, :, None])
    acc = jnp.maximum(acc + bdw.reshape(1, C_in, 1), 0.0)
    wp = wpw.reshape(wpw.shape[0], C_in)                  # (C_out, C_in)
    y = jnp.einsum('oc,bct->bot', wp, acc) + bpw.reshape(1, -1, 1)
    y = jnp.maximum(y, 0.0)
    mean = y.mean(axis=1, keepdims=True)
    var = ((y - mean) ** 2).mean(axis=1, keepdims=True)
    yn = (y - mean) / jnp.sqrt(var + eps)
    yn = yn * gamma.reshape(1, -1, 1) + beta.reshape(1, -1, 1)
    return yn


if __name__ == "__main__":
    # Shapes consistent with the module: batch=2, in_ch=4, out_ch=8,
    # seq_len=16, kernel_size=3, stride=1.
    B, C_IN, C_OUT, T, K, STRIDE = 2, 4, 8, 16, 3, 1

    key = jax.random.PRNGKey(0)
    kx, k1, k2, k3, k4, k5, k6, kx2 = jax.random.split(key, 8)

    x = jax.random.normal(kx, (B, C_IN, T), dtype=jnp.float32)          # NCW

    # Parameters in PyTorch layouts.
    wdw = 0.5 * jax.random.normal(k1, (C_IN, 1, K), dtype=jnp.float32)     # (C_in,1,k)
    bdw = 0.1 * jax.random.normal(k2, (C_IN,), dtype=jnp.float32)
    wpw = 0.5 * jax.random.normal(k3, (C_OUT, C_IN, 1), dtype=jnp.float32)  # (C_out,C_in,1)
    bpw = 0.1 * jax.random.normal(k4, (C_OUT,), dtype=jnp.float32)
    gamma = 1.0 + 0.1 * jax.random.normal(k5, (C_OUT,), dtype=jnp.float32)
    beta = 0.1 * jax.random.normal(k6, (C_OUT,), dtype=jnp.float32)
    params = (wdw, bdw, wpw, bpw, gamma, beta)

    # Test 1: small single-tile path (lane-padded output).
    out = jax.block_until_ready(tds_conv(x, params, kernel_size=K, stride=STRIDE))
    ref = tds_conv_ref(x, params, kernel_size=K, stride=STRIDE)
    assert out.shape == (B, C_OUT, T), out.shape
    assert jnp.allclose(out, ref, atol=1e-4, rtol=1e-4), \
        f"max abs err = {jnp.max(jnp.abs(out - ref))}"

    # Test 2: longer sequence forced into multiple time tiles to exercise the
    # cross-tile halo (previous-tile tail) splice path.
    T2 = 300
    x2 = jax.random.normal(kx2, (B, C_IN, T2), dtype=jnp.float32)
    out2 = jax.block_until_ready(
        tds_conv(x2, params, kernel_size=K, stride=STRIDE, t_block_cap=128))
    ref2 = tds_conv_ref(x2, params, kernel_size=K, stride=STRIDE)
    assert out2.shape == (B, C_OUT, T2), out2.shape
    assert jnp.allclose(out2, ref2, atol=1e-4, rtol=1e-4), \
        f"max abs err = {jnp.max(jnp.abs(out2 - ref2))}"

    print("KERNEL_OK")
</pallas_src>

<mosaic_0001>
module attributes {stable_mosaic.version = 11 : i64} {
  func.func @_tds_kernel(%arg0: i32, %arg1: i32, %arg2: memref<2x4x128xf32, #tpu.memory_space<vmem>>, %arg3: memref<4x3xf32, #tpu.memory_space<vmem>>, %arg4: memref<4x1xf32, #tpu.memory_space<vmem>>, %arg5: memref<8x4xf32, #tpu.memory_space<vmem>>, %arg6: memref<8x1xf32, #tpu.memory_space<vmem>>, %arg7: memref<8x1xf32, #tpu.memory_space<vmem>>, %arg8: memref<8x1xf32, #tpu.memory_space<vmem>>, %arg9: memref<2x8x128xf32, #tpu.memory_space<vmem>>) attributes {dimension_semantics = [#tpu.dimension_semantics<parallel>, #tpu.dimension_semantics<parallel>], iteration_bounds = array<i64: 1, 1>, scalar_prefetch = 0 : i64, scratch_operands = 0 : i64, tpu.core_type = #tpu.core_type<tc>, window_params = [{transform_indices = @transform_0, window_bounds = array<i64: 2, 4, 128>}, {pipeline_mode = #tpu.pipeline_mode<synchronous>, transform_indices = @transform_1, window_bounds = array<i64: 4, 3>}, {pipeline_mode = #tpu.pipeline_mode<synchronous>, transform_indices = @transform_2, window_bounds = array<i64: 4, 1>}, {pipeline_mode = #tpu.pipeline_mode<synchronous>, transform_indices = @transform_3, window_bounds = array<i64: 8, 4>}, {pipeline_mode = #tpu.pipeline_mode<synchronous>, transform_indices = @transform_4, window_bounds = array<i64: 8, 1>}, {pipeline_mode = #tpu.pipeline_mode<synchronous>, transform_indices = @transform_5, window_bounds = array<i64: 8, 1>}, {pipeline_mode = #tpu.pipeline_mode<synchronous>, transform_indices = @transform_6, window_bounds = array<i64: 8, 1>}, {transform_indices = @transform_7, window_bounds = array<i64: 2, 8, 128>}]} {
    %c0 = arith.constant 0 : index
    %c0_0 = arith.constant 0 : index
    %c0_1 = arith.constant 0 : index
    %0 = vector.load %arg2[%c0, %c0_0, %c0_1] : memref<2x4x128xf32, #tpu.memory_space<vmem>>, vector<2x4x128xf32>
    %c0_2 = arith.constant 0 : index
    %c0_3 = arith.constant 0 : index
    %1 = vector.load %arg3[%c0_2, %c0_3] : memref<4x3xf32, #tpu.memory_space<vmem>>, vector<4x3xf32>
    %c0_4 = arith.constant 0 : index
    %c0_5 = arith.constant 0 : index
    %2 = vector.load %arg4[%c0_4, %c0_5] : memref<4x1xf32, #tpu.memory_space<vmem>>, vector<4x1xf32>
    %c0_6 = arith.constant 0 : index
    %c0_7 = arith.constant 0 : index
    %3 = vector.load %arg5[%c0_6, %c0_7] : memref<8x4xf32, #tpu.memory_space<vmem>>, vector<8x4xf32>
    %c0_8 = arith.constant 0 : index
    %c0_9 = arith.constant 0 : index
    %4 = vector.load %arg6[%c0_8, %c0_9] : memref<8x1xf32, #tpu.memory_space<vmem>>, vector<8x1xf32>
    %c0_10 = arith.constant 0 : index
    %c0_11 = arith.constant 0 : index
    %5 = vector.load %arg7[%c0_10, %c0_11] : memref<8x1xf32, #tpu.memory_space<vmem>>, vector<8x1xf32>
    %c0_12 = arith.constant 0 : index
    %c0_13 = arith.constant 0 : index
    %6 = vector.load %arg8[%c0_12, %c0_13] : memref<8x1xf32, #tpu.memory_space<vmem>>, vector<8x1xf32>
    %7 = tpu.iota {dimensions = array<i32: 2>} : vector<1x1x128xi32>
    %cst = arith.constant 0.000000e+00 : f32
    %8 = vector.broadcast %cst : f32 to vector<2x4x128xf32>
    %9 = vector.extract_strided_slice %1 {offsets = [0, 0], sizes = [4, 1], strides = [1, 1]} : vector<4x3xf32> to vector<4x1xf32>
    %10 = vector.shape_cast %9 : vector<4x1xf32> to vector<1x4x1xf32>
    %c2_i32 = arith.constant 2 : i32
    %11 = tpu.dynamic_rotate %0 by %c2_i32 dim 2 : vector<2x4x128xf32>, i32 -> vector<2x4x128xf32>
    %c2_i32_14 = arith.constant 2 : i32
    %12 = vector.broadcast %c2_i32_14 : i32 to vector<1x1x128xi32>
    %13 = arith.cmpi slt, %7, %12 : vector<1x1x128xi32>
    %cst_15 = arith.constant 0.000000e+00 : f32
    %14 = vector.shape_cast %13 : vector<1x1x128xi1> to vector<1x1x128xi1>
    %15 = vector.broadcast %14 : vector<1x1x128xi1> to vector<2x4x128xi1>
    %16 = vector.broadcast %cst_15 : f32 to vector<2x4x128xf32>
    %17 = arith.select %15, %16, %11 : vector<2x4x128xi1>, vector<2x4x128xf32>
    %18 = vector.broadcast %10 : vector<1x4x1xf32> to vector<2x4x128xf32>
    %19 = arith.mulf %17, %18 : vector<2x4x128xf32>
    %20 = arith.addf %8, %19 : vector<2x4x128xf32>
    %21 = vector.extract_strided_slice %1 {offsets = [0, 1], sizes = [4, 1], strides = [1, 1]} : vector<4x3xf32> to vector<4x1xf32>
    %22 = vector.shape_cast %21 : vector<4x1xf32> to vector<1x4x1xf32>
    %c1_i32 = arith.constant 1 : i32
    %23 = tpu.dynamic_rotate %0 by %c1_i32 dim 2 : vector<2x4x128xf32>, i32 -> vector<2x4x128xf32>
    %c1_i32_16 = arith.constant 1 : i32
    %24 = vector.broadcast %c1_i32_16 : i32 to vector<1x1x128xi32>
    %25 = arith.cmpi slt, %7, %24 : vector<1x1x128xi32>
    %cst_17 = arith.constant 0.000000e+00 : f32
    %26 = vector.shape_cast %25 : vector<1x1x128xi1> to vector<1x1x128xi1>
    %27 = vector.broadcast %26 : vector<1x1x128xi1> to vector<2x4x128xi1>
    %28 = vector.broadcast %cst_17 : f32 to vector<2x4x128xf32>
    %29 = arith.select %27, %28, %23 : vector<2x4x128xi1>, vector<2x4x128xf32>
    %30 = vector.broadcast %22 : vector<1x4x1xf32> to vector<2x4x128xf32>
    %31 = arith.mulf %29, %30 : vector<2x4x128xf32>
    %32 = arith.addf %20, %31 : vector<2x4x128xf32>
    %33 = vector.extract_strided_slice %1 {offsets = [0, 2], sizes = [4, 1], strides = [1, 1]} : vector<4x3xf32> to vector<4x1xf32>
    %34 = vector.shape_cast %33 : vector<4x1xf32> to vector<1x4x1xf32>
    %35 = vector.broadcast %34 : vector<1x4x1xf32> to vector<2x4x128xf32>
    %36 = arith.mulf %0, %35 : vector<2x4x128xf32>
    %37 = arith.addf %32, %36 : vector<2x4x128xf32>
    %38 = vector.shape_cast %2 : vector<4x1xf32> to vector<1x4x1xf32>
    %39 = vector.broadcast %38 : vector<1x4x1xf32> to vector<2x4x128xf32>
    %40 = arith.addf %37, %39 : vector<2x4x128xf32>
    %cst_18 = arith.constant 0.000000e+00 : f32
    %41 = vector.broadcast %cst_18 : f32 to vector<2x4x128xf32>
    %42 = arith.maximumf %40, %41 : vector<2x4x128xf32>
    %43 = vector.extract_strided_slice %42 {offsets = [0, 0, 0], sizes = [1, 4, 128], strides = [1, 1, 1]} : vector<2x4x128xf32> to vector<1x4x128xf32>
    %44 = vector.shape_cast %43 : vector<1x4x128xf32> to vector<4x128xf32>
    %cst_19 = arith.constant 0.000000e+00 : f32
    %45 = vector.broadcast %cst_19 : f32 to vector<8x128xf32>
    %46 = vector.extract_strided_slice %3 {offsets = [0, 0], sizes = [8, 1], strides = [1, 1]} : vector<8x4xf32> to vector<8x1xf32>
    %47 = vector.extract_strided_slice %44 {offsets = [0, 0], sizes = [1, 128], strides = [1, 1]} : vector<4x128xf32> to vector<1x128xf32>
    %48 = vector.broadcast %46 : vector<8x1xf32> to vector<8x128xf32>
    %49 = vector.broadcast %47 : vector<1x128xf32> to vector<8x128xf32>
    %50 = arith.mulf %48, %49 : vector<8x128xf32>
    %51 = arith.addf %45, %50 : vector<8x128xf32>
    %52 = vector.extract_strided_slice %3 {offsets = [0, 1], sizes = [8, 1], strides = [1, 1]} : vector<8x4xf32> to vector<8x1xf32>
    %53 = vector.extract_strided_slice %44 {offsets = [1, 0], sizes = [1, 128], strides = [1, 1]} : vector<4x128xf32> to vector<1x128xf32>
    %54 = vector.broadcast %52 : vector<8x1xf32> to vector<8x128xf32>
    %55 = vector.broadcast %53 : vector<1x128xf32> to vector<8x128xf32>
    %56 = arith.mulf %54, %55 : vector<8x128xf32>
    %57 = arith.addf %51, %56 : vector<8x128xf32>
    %58 = vector.extract_strided_slice %3 {offsets = [0, 2], sizes = [8, 1], strides = [1, 1]} : vector<8x4xf32> to vector<8x1xf32>
    %59 = vector.extract_strided_slice %44 {offsets = [2, 0], sizes = [1, 128], strides = [1, 1]} : vector<4x128xf32> to vector<1x128xf32>
    %60 = vector.broadcast %58 : vector<8x1xf32> to vector<8x128xf32>
    %61 = vector.broadcast %59 : vector<1x128xf32> to vector<8x128xf32>
    %62 = arith.mulf %60, %61 : vector<8x128xf32>
    %63 = arith.addf %57, %62 : vector<8x128xf32>
    %64 = vector.extract_strided_slice %3 {offsets = [0, 3], sizes = [8, 1], strides = [1, 1]} : vector<8x4xf32> to vector<8x1xf32>
    %65 = vector.extract_strided_slice %44 {offsets = [3, 0], sizes = [1, 128], strides = [1, 1]} : vector<4x128xf32> to vector<1x128xf32>
    %66 = vector.broadcast %64 : vector<8x1xf32> to vector<8x128xf32>
    %67 = vector.broadcast %65 : vector<1x128xf32> to vector<8x128xf32>
    %68 = arith.mulf %66, %67 : vector<8x128xf32>
    %69 = arith.addf %63, %68 : vector<8x128xf32>
    %70 = vector.broadcast %4 : vector<8x1xf32> to vector<8x128xf32>
    %71 = arith.addf %69, %70 : vector<8x128xf32>
    %cst_20 = arith.constant 0.000000e+00 : f32
    %72 = vector.broadcast %cst_20 : f32 to vector<8x128xf32>
    %73 = arith.maximumf %71, %72 : vector<8x128xf32>
    %cst_21 = arith.constant dense<0.000000e+00> : vector<128xf32>
    %74 = vector.multi_reduction <add>, %73, %cst_21 [0] : vector<8x128xf32> to vector<128xf32>
    %75 = vector.shape_cast %74 : vector<128xf32> to vector<1x128xf32>
    %76 = arith.mulf %73, %73 : vector<8x128xf32>
    %cst_22 = arith.constant dense<0.000000e+00> : vector<128xf32>
    %77 = vector.multi_reduction <add>, %76, %cst_22 [0] : vector<8x128xf32> to vector<128xf32>
    %78 = vector.shape_cast %77 : vector<128xf32> to vector<1x128xf32>
    %cst_23 = arith.constant 1.250000e-01 : f32
    %79 = vector.broadcast %cst_23 : f32 to vector<1x128xf32>
    %80 = arith.mulf %75, %79 : vector<1x128xf32>
    %cst_24 = arith.constant 1.250000e-01 : f32
    %81 = vector.broadcast %cst_24 : f32 to vector<1x128xf32>
    %82 = arith.mulf %78, %81 : vector<1x128xf32>
    %83 = arith.mulf %80, %80 : vector<1x128xf32>
    %84 = arith.subf %82, %83 : vector<1x128xf32>
    %cst_25 = arith.constant 0.000000e+00 : f32
    %85 = vector.broadcast %cst_25 : f32 to vector<1x128xf32>
    %86 = arith.maximumf %84, %85 : vector<1x128xf32>
    %87 = vector.broadcast %80 : vector<1x128xf32> to vector<8x128xf32>
    %88 = arith.subf %73, %87 : vector<8x128xf32>
    %cst_26 = arith.constant 9.99999974E-6 : f32
    %89 = vector.broadcast %cst_26 : f32 to vector<1x128xf32>
    %90 = arith.addf %86, %89 : vector<1x128xf32>
    %91 = math.rsqrt %90 : vector<1x128xf32>
    %92 = vector.broadcast %91 : vector<1x128xf32> to vector<8x128xf32>
    %93 = arith.mulf %88, %92 : vector<8x128xf32>
    %94 = vector.broadcast %5 : vector<8x1xf32> to vector<8x128xf32>
    %95 = arith.mulf %93, %94 : vector<8x128xf32>
    %96 = vector.broadcast %6 : vector<8x1xf32> to vector<8x128xf32>
    %97 = arith.addf %95, %96 : vector<8x128xf32>
    %c0_27 = arith.constant 0 : index
    %c0_28 = arith.constant 0 : index
    %c0_29 = arith.constant 0 : index
    %98 = vector.load %arg9[%c0_27, %c0_28, %c0_29] : memref<2x8x128xf32, #tpu.memory_space<vmem>>, vector<1x8x128xf32>
    %99 = vector.shape_cast %98 : vector<1x8x128xf32> to vector<8x128xf32>
    %100 = vector.shape_cast %97 : vector<8x128xf32> to vector<1x8x128xf32>
    tpu.vector_store %arg9[%c0_27, %c0_28, %c0_29], %100 {strides = array<i32>} : memref<2x8x128xf32, #tpu.memory_space<vmem>>, vector<1x8x128xf32>,
    %101 = vector.extract_strided_slice %42 {offsets = [1, 0, 0], sizes = [1, 4, 128], strides = [1, 1, 1]} : vector<2x4x128xf32> to vector<1x4x128xf32>
    %102 = vector.shape_cast %101 : vector<1x4x128xf32> to vector<4x128xf32>
    %cst_30 = arith.constant 0.000000e+00 : f32
    %103 = vector.broadcast %cst_30 : f32 to vector<8x128xf32>
    %104 = vector.extract_strided_slice %3 {offsets = [0, 0], sizes = [8, 1], strides = [1, 1]} : vector<8x4xf32> to vector<8x1xf32>
    %105 = vector.extract_strided_slice %102 {offsets = [0, 0], sizes = [1, 128], strides = [1, 1]} : vector<4x128xf32> to vector<1x128xf32>
    %106 = vector.broadcast %104 : vector<8x1xf32> to vector<8x128xf32>
    %107 = vector.broadcast %105 : vector<1x128xf32> to vector<8x128xf32>
    %108 = arith.mulf %106, %107 : vector<8x128xf32>
    %109 = arith.addf %103, %108 : vector<8x128xf32>
    %110 = vector.extract_strided_slice %3 {offsets = [0, 1], sizes = [8, 1], strides = [1, 1]} : vector<8x4xf32> to vector<8x1xf32>
    %111 = vector.extract_strided_slice %102 {offsets = [1, 0], sizes = [1, 128], strides = [1, 1]} : vector<4x128xf32> to vector<1x128xf32>
    %112 = vector.broadcast %110 : vector<8x1xf32> to vector<8x128xf32>
    %113 = vector.broadcast %111 : vector<1x128xf32> to vector<8x128xf32>
    %114 = arith.mulf %112, %113 : vector<8x128xf32>
    %115 = arith.addf %109, %114 : vector<8x128xf32>
    %116 = vector.extract_strided_slice %3 {offsets = [0, 2], sizes = [8, 1], strides = [1, 1]} : vector<8x4xf32> to vector<8x1xf32>
    %117 = vector.extract_strided_slice %102 {offsets = [2, 0], sizes = [1, 128], strides = [1, 1]} : vector<4x128xf32> to vector<1x128xf32>
    %118 = vector.broadcast %116 : vector<8x1xf32> to vector<8x128xf32>
    %119 = vector.broadcast %117 : vector<1x128xf32> to vector<8x128xf32>
    %120 = arith.mulf %118, %119 : vector<8x128xf32>
    %121 = arith.addf %115, %120 : vector<8x128xf32>
    %122 = vector.extract_strided_slice %3 {offsets = [0, 3], sizes = [8, 1], strides = [1, 1]} : vector<8x4xf32> to vector<8x1xf32>
    %123 = vector.extract_strided_slice %102 {offsets = [3, 0], sizes = [1, 128], strides = [1, 1]} : vector<4x128xf32> to vector<1x128xf32>
    %124 = vector.broadcast %122 : vector<8x1xf32> to vector<8x128xf32>
    %125 = vector.broadcast %123 : vector<1x128xf32> to vector<8x128xf32>
    %126 = arith.mulf %124, %125 : vector<8x128xf32>
    %127 = arith.addf %121, %126 : vector<8x128xf32>
    %128 = vector.broadcast %4 : vector<8x1xf32> to vector<8x128xf32>
    %129 = arith.addf %127, %128 : vector<8x128xf32>
    %cst_31 = arith.constant 0.000000e+00 : f32
    %130 = vector.broadcast %cst_31 : f32 to vector<8x128xf32>
    %131 = arith.maximumf %129, %130 : vector<8x128xf32>
    %cst_32 = arith.constant dense<0.000000e+00> : vector<128xf32>
    %132 = vector.multi_reduction <add>, %131, %cst_32 [0] : vector<8x128xf32> to vector<128xf32>
    %133 = vector.shape_cast %132 : vector<128xf32> to vector<1x128xf32>
    %134 = arith.mulf %131, %131 : vector<8x128xf32>
    %cst_33 = arith.constant dense<0.000000e+00> : vector<128xf32>
    %135 = vector.multi_reduction <add>, %134, %cst_33 [0] : vector<8x128xf32> to vector<128xf32>
    %136 = vector.shape_cast %135 : vector<128xf32> to vector<1x128xf32>
    %cst_34 = arith.constant 1.250000e-01 : f32
    %137 = vector.broadcast %cst_34 : f32 to vector<1x128xf32>
    %138 = arith.mulf %133, %137 : vector<1x128xf32>
    %cst_35 = arith.constant 1.250000e-01 : f32
    %139 = vector.broadcast %cst_35 : f32 to vector<1x128xf32>
    %140 = arith.mulf %136, %139 : vector<1x128xf32>
    %141 = arith.mulf %138, %138 : vector<1x128xf32>
    %142 = arith.subf %140, %141 : vector<1x128xf32>
    %cst_36 = arith.constant 0.000000e+00 : f32
    %143 = vector.broadcast %cst_36 : f32 to vector<1x128xf32>
    %144 = arith.maximumf %142, %143 : vector<1x128xf32>
    %145 = vector.broadcast %138 : vector<1x128xf32> to vector<8x128xf32>
    %146 = arith.subf %131, %145 : vector<8x128xf32>
    %cst_37 = arith.constant 9.99999974E-6 : f32
    %147 = vector.broadcast %cst_37 : f32 to vector<1x128xf32>
    %148 = arith.addf %144, %147 : vector<1x128xf32>
    %149 = math.rsqrt %148 : vector<1x128xf32>
    %150 = vector.broadcast %149 : vector<1x128xf32> to vector<8x128xf32>
    %151 = arith.mulf %146, %150 : vector<8x128xf32>
    %152 = vector.broadcast %5 : vector<8x1xf32> to vector<8x128xf32>
    %153 = arith.mulf %151, %152 : vector<8x128xf32>
    %154 = vector.broadcast %6 : vector<8x1xf32> to vector<8x128xf32>
    %155 = arith.addf %153, %154 : vector<8x128xf32>
    %c1 = arith.constant 1 : index
    %c0_38 = arith.constant 0 : index
    %c0_39 = arith.constant 0 : index
    %156 = vector.load %arg9[%c1, %c0_38, %c0_39] : memref<2x8x128xf32, #tpu.memory_space<vmem>>, vector<1x8x128xf32>
    %157 = vector.shape_cast %156 : vector<1x8x128xf32> to vector<8x128xf32>
    %158 = vector.shape_cast %155 : vector<8x128xf32> to vector<1x8x128xf32>
    tpu.vector_store %arg9[%c1, %c0_38, %c0_39], %158 {strides = array<i32>} : memref<2x8x128xf32, #tpu.memory_space<vmem>>, vector<1x8x128xf32>,
    return
  }
  func.func @transform_0(%arg0: i32, %arg1: i32) -> (i32, i32, i32) {
    %c0_i32 = arith.constant 0 : i32
    %c0_i32_0 = arith.constant 0 : i32
    return %arg0, %c0_i32, %arg1 : i32, i32, i32
  }
  func.func @transform_1(%arg0: i32, %arg1: i32) -> (i32, i32) {
    %c0_i32 = arith.constant 0 : i32
    %c0_i32_0 = arith.constant 0 : i32
    %c0_i32_1 = arith.constant 0 : i32
    return %c0_i32, %c0_i32_0 : i32, i32
  }
  func.func @transform_2(%arg0: i32, %arg1: i32) -> (i32, i32) {
    %c0_i32 = arith.constant 0 : i32
    %c0_i32_0 = arith.constant 0 : i32
    %c0_i32_1 = arith.constant 0 : i32
    return %c0_i32, %c0_i32_0 : i32, i32
  }
  func.func @transform_3(%arg0: i32, %arg1: i32) -> (i32, i32) {
    %c0_i32 = arith.constant 0 : i32
    %c0_i32_0 = arith.constant 0 : i32
    %c0_i32_1 = arith.constant 0 : i32
    return %c0_i32, %c0_i32_0 : i32, i32
  }
  func.func @transform_4(%arg0: i32, %arg1: i32) -> (i32, i32) {
    %c0_i32 = arith.constant 0 : i32
    %c0_i32_0 = arith.constant 0 : i32
    %c0_i32_1 = arith.constant 0 : i32
    return %c0_i32, %c0_i32_0 : i32, i32
  }
  func.func @transform_5(%arg0: i32, %arg1: i32) -> (i32, i32) {
    %c0_i32 = arith.constant 0 : i32
    %c0_i32_0 = arith.constant 0 : i32
    %c0_i32_1 = arith.constant 0 : i32
    return %c0_i32, %c0_i32_0 : i32, i32
  }
  func.func @transform_6(%arg0: i32, %arg1: i32) -> (i32, i32) {
    %c0_i32 = arith.constant 0 : i32
    %c0_i32_0 = arith.constant 0 : i32
    %c0_i32_1 = arith.constant 0 : i32
    return %c0_i32, %c0_i32_0 : i32, i32
  }
  func.func @transform_7(%arg0: i32, %arg1: i32) -> (i32, i32, i32) {
    %c0_i32 = arith.constant 0 : i32
    %c0_i32_0 = arith.constant 0 : i32
    return %arg0, %c0_i32, %arg1 : i32, i32, i32
  }
}

</mosaic_0001>

<llo_original>
// kernel: tpu_custom_call.1
$region0: #{tpu_custom_call.1}
  #allocation0 [shape = 'u32[]', space=smem, size = 0x4, offset = 0x4, fixed_abs, tag = 'smem constant byte address 0x4 - core index']
  #allocation1 [shape = 'u32[144,128]{1,0:T(1,128)}', space=vmem, size = 0x12000, scoped, tag = 'internal scratch']
  %s0 = inlined_call_operand.vmem [shape: f32[2,4,128], index: 0, kind: input, shape index: {}]
  %s1 = inlined_call_operand.vmem [shape: f32[4,3], index: 1, kind: input, shape index: {}]
  %s2 = inlined_call_operand.vmem [shape: f32[4,1], index: 2, kind: input, shape index: {}]
  %s3 = inlined_call_operand.vmem [shape: f32[8,4], index: 3, kind: input, shape index: {}]
  %s4 = inlined_call_operand.vmem [shape: f32[8,1], index: 4, kind: input, shape index: {}]
  %s5 = inlined_call_operand.vmem [shape: f32[8,1], index: 5, kind: input, shape index: {}]
  %s6 = inlined_call_operand.vmem [shape: f32[8,1], index: 6, kind: input, shape index: {}]
  %s7 = inlined_call_operand.hbm [shape: f32[2,8,128], index: 7, kind: output, shape index: {}]
  %s8 = sld [smem:[#allocation0]]
  $region38: #{tpu_custom_call.1} parent=0
    _
  %s10 = ssub.s32 1, %s8
  %s11 = scalar_select 0, %s10, %s8
  $region1: #{tpu_custom_call.1} parent=0
    #allocation2 [shape = 'u8[8192]{0}', space=vmem, size = 0x2000, scoped, tag = 'output window, operand 0, single buffered']
    #allocation3 [shape = 's32[1]{0}', space=sflag, size = 0x4, scoped, tag = 'scoped memory for tpu_custom_call.1']
    %12 = vsyncpa [#allocation3], 0
    // Predicated region
    $region2: #{tpu_custom_call.1} parent=1 // pred_check
      _
    $region3: #{tpu_custom_call.1} parent=1 // pred_check_branch
      %14 = sbr.rel (0) target = $region5
    $region4: #{tpu_custom_call.1} parent=1 // pred_region
      _
    $region5: #{tpu_custom_call.1} parent=1 // pred_fallthru
      _
    // Predicated region
    $region6: #{tpu_custom_call.1} parent=1 // pred_check
      _
    $region7: #{tpu_custom_call.1} parent=1 // pred_check_branch
      %16 = sbr.rel (0) target = $region9
    $region8: #{tpu_custom_call.1} parent=1 // pred_region
      _
    $region9: #{tpu_custom_call.1} parent=1 // pred_fallthru
      _
    // Predicated region
    $region10: #{tpu_custom_call.1} parent=1 // pred_check
      _
    $region11: #{tpu_custom_call.1} parent=1 // pred_check_branch
      %18 = sbr.rel (0) target = $region13
    $region12: #{tpu_custom_call.1} parent=1 // pred_region
      _
    $region13: #{tpu_custom_call.1} parent=1 // pred_fallthru
      _
    // Predicated region
    $region14: #{tpu_custom_call.1} parent=1 // pred_check
      _
    $region15: #{tpu_custom_call.1} parent=1 // pred_check_branch
      %20 = sbr.rel (0) target = $region17
    $region16: #{tpu_custom_call.1} parent=1 // pred_region
      _
    $region17: #{tpu_custom_call.1} parent=1 // pred_fallthru
      _
    // Predicated region
    $region18: #{tpu_custom_call.1} parent=1 // pred_check
      _
    $region19: #{tpu_custom_call.1} parent=1 // pred_check_branch
      %22 = sbr.rel (0) target = $region21
    $region20: #{tpu_custom_call.1} parent=1 // pred_region
      _
    $region21: #{tpu_custom_call.1} parent=1 // pred_fallthru
      _
    // Predicated region
    $region22: #{tpu_custom_call.1} parent=1 // pred_check
      _
    $region23: #{tpu_custom_call.1} parent=1 // pred_check_branch
      %24 = sbr.rel (0) target = $region25
    $region24: #{tpu_custom_call.1} parent=1 // pred_region
      _
    $region25: #{tpu_custom_call.1} parent=1 // pred_fallthru
      _
    // Predicated region
    $region26: #{tpu_custom_call.1} parent=1 // pred_check
      _
    $region27: #{tpu_custom_call.1} parent=1 // pred_check_branch
      %26 = sbr.rel (0) target = $region29
    $region28: #{tpu_custom_call.1} parent=1 // pred_region
      _
    $region29: #{tpu_custom_call.1} parent=1 // pred_fallthru
      _
    %v27 = vld [vmem:[%s0] sm:$0xf]
    %v28 = vld [vmem:[%s0 + $0x4] sm:$0xf]
    %v29 = vld [vmem:[%s1] sm:$0xf]
    %v30 = vld [vmem:[%s2] sm:$0xf]
    %v31 = vld [vmem:[%s3] sm:$0xff]
    %v32 = vld [vmem:[%s4] sm:$0xff]
    %v33 = vld [vmem:[%s5] sm:$0xff]
    %v34 = vld [vmem:[%s6] sm:$0xff]
    %v35 = vlaneseq
    %v36 = vand.u32 %v35, 127
    %37 = vrot.lane.b32.xlu0 %v27, 2
    %v38 = vpop.permute.xlu0 %37
    %39 = vrot.lane.b32.xlu0 %v28, 2
    %v40 = vpop.permute.xlu0 %39
    %vm41 = vcmp.lt.s32.totalorder %v36, 2
    %v42 = vsel %vm41, 1, 0
    %vm43 = vcmp.eq.s32.totalorder %v42, 1
    %v44 = vsel %vm43, 0.0, %v38
    %v45 = vsel %vm43, 0.0, %v40
    %47 = vset.pattern.permute.xlu0 0
    %48 = vperm.xlu0 %47, %v29
    %v49 = vpop.permute.xlu0 %48
    %v51 = vmul.f32 %v44, %v49
    %v52 = vmul.f32 %v45, %v49
    %v53 = vadd.f32 %v51, 0.0
    %v54 = vadd.f32 %v52, 0.0
    %55 = vrot.lane.b32.xlu0 %v27, 1
    %v56 = vpop.permute.xlu0 %55
    %57 = vrot.lane.b32.xlu0 %v28, 1
    %v58 = vpop.permute.xlu0 %57
    %vm59 = vcmp.lt.s32.totalorder %v36, 1
    %v60 = vsel %vm59, 1, 0
    %vm61 = vcmp.eq.s32.totalorder %v60, 1
    %v62 = vsel %vm61, 0.0, %v56
    %v63 = vsel %vm61, 0.0, %v58
    %64 = vset.pattern.permute.xlu0 1
    %65 = vperm.xlu0 %64, %v29
    %v66 = vpop.permute.xlu0 %65
    %v68 = vmul.f32 %v62, %v66
    %v69 = vmul.f32 %v63, %v66
    %v70 = vadd.f32 %v53, %v68
    %v71 = vadd.f32 %v54, %v69
    %72 = vset.pattern.permute.xlu0 2
    %73 = vperm.xlu0 %72, %v29
    %v74 = vpop.permute.xlu0 %73
    %v76 = vmul.f32 %v27, %v74
    %v77 = vmul.f32 %v28, %v74
    %v78 = vadd.f32 %v70, %v76
    %v79 = vadd.f32 %v71, %v77
    %81 = vset.pattern.permute.xlu0 0
    %82 = vperm.xlu0 %81, %v30
    %v83 = vpop.permute.xlu0 %82
    %v85 = vadd.f32 %v78, %v83
    %v86 = vadd.f32 %v79, %v83
    %v87 = vmax.f32 %v85, 0.0
    %v88 = vmax.f32 %v86, 0.0
    %90 = vset.pattern.permute.xlu0 0
    %91 = vperm.xlu0 %90, %v31
    %v92 = vpop.permute.xlu0 %91
    %v94 = vlaneseq
    %v95 = vshrl.u32 %v94, 7
    %v96 = vsub.s32 0, %v95
    %v97 = vrot.slane %v87, %v96
    %v98 = vmul.f32 %v92, %v97
    %v99 = vadd.f32 %v98, 0.0
    %100 = vset.pattern.permute.xlu0 1
    %101 = vperm.xlu0 %100, %v31
    %v102 = vpop.permute.xlu0 %101
    %v104 = vlaneseq
    %v105 = vshrl.u32 %v104, 7
    %v106 = vsub.s32 1, %v105
    %v107 = vrot.slane %v87, %v106
    %v108 = vmul.f32 %v102, %v107
    %v109 = vadd.f32 %v99, %v108
    %110 = vset.pattern.permute.xlu0 2
    %111 = vperm.xlu0 %110, %v31
    %v112 = vpop.permute.xlu0 %111
    %v114 = vlaneseq
    %v115 = vshrl.u32 %v114, 7
    %v116 = vsub.s32 2, %v115
    %v117 = vrot.slane %v87, %v116
    %v118 = vmul.f32 %v112, %v117
    %v119 = vadd.f32 %v109, %v118
    %120 = vset.pattern.permute.xlu0 3
    %121 = vperm.xlu0 %120, %v31
    %v122 = vpop.permute.xlu0 %121
    %v124 = vlaneseq
    %v125 = vshrl.u32 %v124, 7
    %v126 = vsub.s32 3, %v125
    %v127 = vrot.slane %v87, %v126
    %v128 = vmul.f32 %v122, %v127
    %v129 = vadd.f32 %v119, %v128
    %131 = vset.pattern.permute.xlu0 0
    %132 = vperm.xlu0 %131, %v32
    %v133 = vpop.permute.xlu0 %132
    %v135 = vadd.f32 %v129, %v133
    %v136 = vmax.f32 %v135, 0.0
    %v137 = vrot.slane %v136, 4
    %v138 = vadd.f32 %v136, %v137
    %v139 = vrot.slane %v138, 2
    %v140 = vadd.f32 %v138, %v139
    %v141 = vrot.slane %v140, 1
    %v142 = vadd.f32 %v140, %v141
    %v143 = vmul.f32 %v136, %v136
    %v144 = vrot.slane %v143, 4
    %v145 = vadd.f32 %v143, %v144
    %v146 = vrot.slane %v145, 2
    %v147 = vadd.f32 %v145, %v146
    %v148 = vrot.slane %v147, 1
    %v149 = vadd.f32 %v147, %v148
    %v150 = vmul.f32 %v142, 0.125
    %v151 = vmul.f32 %v149, 0.125
    %v152 = vmul.f32 %v150, %v150
    %v153 = vsub.f32 %v151, %v152
    %v154 = vmax.f32 %v153, 0.0
    %v155 = vsub.f32 %v136, %v150
    %v156 = vadd.f32 %v154, 1e-05
    %v157 = vrsqrt.pop %v156
    %v158 = vmul.f32 %v155, %v157
    %160 = vset.pattern.permute.xlu0 0
    %161 = vperm.xlu0 %160, %v33
    %v162 = vpop.permute.xlu0 %161
    %v164 = vmul.f32 %v158, %v162
    %166 = vset.pattern.permute.xlu0 0
    %167 = vperm.xlu0 %166, %v34
    %v168 = vpop.permute.xlu0 %167
    %v170 = vadd.f32 %v164, %v168
    %171 = vst [vmem:[#allocation2] sm:$0xff] %v170
    %v172 = vlaneseq
    %v173 = vshrl.u32 %v172, 7
    %v174 = vsub.s32 0, %v173
    %v175 = vrot.slane %v88, %v174
    %v176 = vmul.f32 %v92, %v175
    %v177 = vadd.f32 %v176, 0.0
    %v178 = vlaneseq
    %v179 = vshrl.u32 %v178, 7
    %v180 = vsub.s32 1, %v179
    %v181 = vrot.slane %v88, %v180
    %v182 = vmul.f32 %v102, %v181
    %v183 = vadd.f32 %v177, %v182
    %v184 = vlaneseq
    %v185 = vshrl.u32 %v184, 7
    %v186 = vsub.s32 2, %v185
    %v187 = vrot.slane %v88, %v186
    %v188 = vmul.f32 %v112, %v187
    %v189 = vadd.f32 %v183, %v188
    %v190 = vlaneseq
    %v191 = vshrl.u32 %v190, 7
    %v192 = vsub.s32 3, %v191
    %v193 = vrot.slane %v88, %v192
    %v194 = vmul.f32 %v122, %v193
    %v195 = vadd.f32 %v189, %v194
    %v196 = vadd.f32 %v195, %v133
    %v197 = vmax.f32 %v196, 0.0
    %v198 = vrot.slane %v197, 4
    %v199 = vadd.f32 %v197, %v198
    %v200 = vrot.slane %v199, 2
    %v201 = vadd.f32 %v199, %v200
    %v202 = vrot.slane %v201, 1
    %v203 = vadd.f32 %v201, %v202
    %v204 = vmul.f32 %v197, %v197
    %v205 = vrot.slane %v204, 4
    %v206 = vadd.f32 %v204, %v205
    %v207 = vrot.slane %v206, 2
    %v208 = vadd.f32 %v206, %v207
    %v209 = vrot.slane %v208, 1
    %v210 = vadd.f32 %v208, %v209
    %v211 = vmul.f32 %v203, 0.125
    %v212 = vmul.f32 %v210, 0.125
    %v213 = vmul.f32 %v211, %v211
    %v214 = vsub.f32 %v212, %v213
    %v215 = vmax.f32 %v214, 0.0
    %v216 = vsub.f32 %v197, %v211
    %v217 = vadd.f32 %v215, 1e-05
    %v218 = vrsqrt.pop %v217
    %v219 = vmul.f32 %v216, %v218
    %v220 = vmul.f32 %v219, %v162
    %v221 = vadd.f32 %v220, %v168
    %s222 = scalar_lea.vmem [#allocation2], 8
    %223 = vst [vmem:[%s222] sm:$0xff] %v221
    // Predicated region
    $region30: #{tpu_custom_call.1} parent=1 // pred_check
      _
    $region31: #{tpu_custom_call.1} parent=1 // pred_check_branch
      %225 = sbr.rel (0) target = $region33
    $region32: #{tpu_custom_call.1} parent=1 // pred_region
      %s227 = ssub.s32 256, 256
      %228 = vsyncadd [#allocation3], %s227
      %s229 = sshll.u32 [#allocation2], 4
      %s230 = int_to_ptr.vmem [resolvable:$true] %s229
      %235 = dma.vmem_to_hbm [thread:$0]  %s230, 256, %s7, [#allocation3], 128, 128, 8
    $region33: #{tpu_custom_call.1} parent=1 // pred_fallthru
      _
    // Predicated region
    $region34: #{tpu_custom_call.1} parent=1 // pred_check
      _
    $region35: #{tpu_custom_call.1} parent=1 // pred_check_branch
      %237 = sbr.rel (0) target = $region37
    $region36: #{tpu_custom_call.1} parent=1 // pred_region
      %238 = dma.done [#allocation3], 256
    $region37: #{tpu_custom_call.1} parent=1 // pred_fallthru
      _
    %239 = vsyncpa [#allocation3], 1

</llo_original>
